<compile_context>
chip_gen: v6e
topology: v6e:2x2x1
jax: 0.10.0
libtpu: 0.0.40
codegen_flags: <defaults>
</compile_context>

<pallas_src>
import numpy as np
import jax
import jax.numpy as jnp
from jax import lax
from jax.experimental import pallas as pl
from jax.experimental.pallas import tpu as pltpu


# ----------------------------------------------------------------------------
# Host-side glue: dense GCN-normalized adjacency, matching torch_geometric's
# gcn_norm with add_self_loops=True, improved=False, flow='source_to_target'.
# ----------------------------------------------------------------------------
def build_normalized_adjacency(edge_index, edge_weight, n_node):
    src = np.asarray(edge_index[0], dtype=np.int64)
    dst = np.asarray(edge_index[1], dtype=np.int64)
    w = np.asarray(edge_weight, dtype=np.float32)

    # add_remaining_self_loops (fill_value = 1.0); input graph has no self loops
    loop = np.arange(n_node, dtype=np.int64)
    src = np.concatenate([src, loop])
    dst = np.concatenate([dst, loop])
    w = np.concatenate([w, np.ones(n_node, dtype=np.float32)])

    # degree computed on the target (col) index
    deg = np.zeros(n_node, dtype=np.float32)
    np.add.at(deg, dst, w)
    dinv = np.where(deg > 0, deg ** -0.5, 0.0).astype(np.float32)

    norm = dinv[src] * w * dinv[dst]

    # aggregation at target:  y[dst] += norm * x[src]  =>  A_hat[dst, src] = norm
    A = np.zeros((n_node, n_node), dtype=np.float32)
    np.add.at(A, (dst, src), norm)
    return A


def _round_up(x, m):
    return ((x + m - 1) // m) * m


# ----------------------------------------------------------------------------
# Pallas kernel: fused MLP (diffusion pre-folded into W0) + fc (+ softmax).
# ----------------------------------------------------------------------------
def _make_kernel(nb_layers, softmax):
    def kernel(*refs):
        x_ref = refs[0]
        wb_refs = refs[1:1 + 2 * (nb_layers + 1)]
        out_ref = refs[-1]

        h = x_ref[...]                                   # (TB, F) f32

        # Hidden layers: Linear + ReLU (dropout p=0 -> identity;
        # batch_norm=False default). All-f32 matmuls: MXU time is negligible
        # in this HBM-bound kernel, so f32 is a free accuracy win.
        for i in range(nb_layers):
            w = wb_refs[2 * i][...]                      # f32 (in, out)
            b = wb_refs[2 * i + 1][...]                  # f32 (1, out)
            h = jnp.dot(h, w, preferred_element_type=jnp.float32) + b
            h = jnp.maximum(h, 0.0)

        # Final fc -> (TB, nb_classes), unpadded (lane-narrow store is cheap;
        # the old 128-column f32 padding dominated HBM write traffic).
        wf = wb_refs[2 * nb_layers][...]                 # f32 (H, nb_classes)
        bf = wb_refs[2 * nb_layers + 1][...]             # f32 (1, nb_classes)
        logits = jnp.dot(h, wf, preferred_element_type=jnp.float32) + bf

        if softmax:
            # Exact softmax over the (unpadded) class dimension.
            m = jnp.max(logits, axis=1, keepdims=True)
            e = jnp.exp(logits - m)
            logits = e / jnp.sum(e, axis=1, keepdims=True)

        out_ref[...] = logits

    return kernel


def diffuse_mlp_forward(x, params, nb_classes, *, softmax=False, block_batch=512):
    """x: (B, nb_feat) f32.
    params: [W0_folded, b0, W1, b1, ..., Wfc, bfc] with Wi (in, out), bi (1, out);
    the constant diffusion is already folded into W0 (W0_folded = A_hat^T @ W0)."""
    B, F = x.shape
    nb_layers = len(params) // 2 - 1

    prepped = [jnp.asarray(p, jnp.float32) for p in params]

    # Sublane-align the batch. This only materializes a (tiny) pad for
    # misaligned / very small batches; for B % 8 == 0 no copy of x is made.
    B8 = _round_up(max(B, 8), 8)
    if B8 != B:
        x = jnp.pad(x, ((0, B8 - B), (0, 0)))

    # Tile size: >=512 rows already sits near the HBM roofline, while staying
    # small enough to give >=2 grid steps per TensorCore on v7x so each core
    # gets DMA/compute overlap. VMEM footprint (~2 MiB) is never the limit.
    TB = min(block_batch, B8)
    num_tiles = pl.cdiv(B8, TB)   # ragged last block: OOB reads ignored, OOB writes dropped

    in_specs = [pl.BlockSpec((TB, F), lambda i: (i, 0))]
    # Weights/biases: constant block index -> DMA'd once, VMEM-resident.
    in_specs += [pl.BlockSpec(p.shape, lambda i: (0, 0)) for p in prepped]
    # Unpadded output block: last dim equals the full array dim (legal), so the
    # writeback is only nb_classes f32 per row instead of 128.
    out_spec = pl.BlockSpec((TB, nb_classes), lambda i: (i, 0))

    out = pl.pallas_call(
        _make_kernel(nb_layers, softmax),
        out_shape=jax.ShapeDtypeStruct((B8, nb_classes), jnp.float32),
        grid=(num_tiles,),
        in_specs=in_specs,
        out_specs=out_spec,
        compiler_params=pltpu.CompilerParams(
            dimension_semantics=("parallel",)),
    )(x, *prepped)

    return out[:B]


# ----------------------------------------------------------------------------
# Deterministic parameter / input construction and test runs.
# ----------------------------------------------------------------------------
if __name__ == "__main__":
    # Small shapes implied by the module.
    batch_size = 2
    nb_feat = 16        # == n_node (one feature per graph node)
    nb_hidden_feat = 32
    nb_classes = 4
    nb_layers = 2

    # Deterministic ring graph over the nb_feat nodes (both directions).
    srcs, dsts, ws = [], [], []
    for i in range(nb_feat):
        j = (i + 1) % nb_feat
        wgt = 0.5 + 0.05 * (i % 4)
        srcs += [i, j]
        dsts += [j, i]
        ws += [wgt, wgt]
    edge_index = np.stack([np.array(srcs), np.array(dsts)], axis=0)  # (2, n_edge)
    edge_weight = np.array(ws, dtype=np.float32)                     # (n_edge,)

    A_hat = build_normalized_adjacency(edge_index, edge_weight, nb_feat)
    adj_t = jnp.asarray(A_hat.T)   # (F, F): forward is x @ A_hat^T

    # Deterministic MLP parameters (shapes from the module's __init__).
    key = jax.random.PRNGKey(0)
    feat_list = [nb_feat] + [nb_hidden_feat] * nb_layers
    raw_params = []
    for i in range(nb_layers):
        key, kw, kb = jax.random.split(key, 3)
        fan_in, fan_out = feat_list[i], feat_list[i + 1]
        bound = 1.0 / np.sqrt(fan_in)
        raw_params.append(jax.random.uniform(kw, (fan_in, fan_out), jnp.float32,
                                             minval=-bound, maxval=bound))
        raw_params.append(jax.random.uniform(kb, (1, fan_out), jnp.float32,
                                             minval=-bound, maxval=bound))
    key, kw, kb = jax.random.split(key, 3)
    bound = 1.0 / np.sqrt(feat_list[-1])
    raw_params.append(jax.random.uniform(kw, (feat_list[-1], nb_classes), jnp.float32,
                                         minval=-bound, maxval=bound))
    raw_params.append(jax.random.uniform(kb, (1, nb_classes), jnp.float32,
                                         minval=-bound, maxval=bound))

    # Fold the constant diffusion into the first Linear (host-side, f32).
    folded = list(raw_params)
    folded[0] = jnp.dot(adj_t, raw_params[0], precision=lax.Precision.HIGHEST)

    # Inputs: the module-sized small batch, a larger batch exercising multiple
    # grid steps (4 tiles at TB=512 -> 2 per TensorCore on v7x), and a
    # non-divisible batch exercising the ragged (no host pad) last block.
    key, kx = jax.random.split(key)
    x_small = jax.random.normal(kx, (batch_size, nb_feat), jnp.float32)
    key, kx2 = jax.random.split(key)
    x_large = jax.random.normal(kx2, (2048, nb_feat), jnp.float32)
    key, kx3 = jax.random.split(key)
    x_ragged = jax.random.normal(kx3, (600, nb_feat), jnp.float32)

    # Reference with the original module's semantics (explicit diffusion
    # matmul, all f32); the kernel is also f32 end-to-end now.
    def ref_original(x_in, use_softmax):
        h = jnp.dot(x_in, adj_t, precision=lax.Precision.HIGHEST)
        for i in range(nb_layers):
            h = jnp.maximum(
                jnp.dot(h, raw_params[2 * i], precision=lax.Precision.HIGHEST)
                + raw_params[2 * i + 1], 0.0)
        logits = (jnp.dot(h, raw_params[2 * nb_layers],
                          precision=lax.Precision.HIGHEST)
                  + raw_params[2 * nb_layers + 1])
        if use_softmax:
            logits = jax.nn.softmax(logits, axis=1)
        return logits

    for x_in in (x_small, x_large, x_ragged):
        out = jax.block_until_ready(
            diffuse_mlp_forward(x_in, folded, nb_classes, softmax=False))
        assert out.shape == (x_in.shape[0], nb_classes)
        np.testing.assert_allclose(np.asarray(out),
                                   np.asarray(ref_original(x_in, False)),
                                   rtol=1e-3, atol=1e-3)

    # Softmax path (exact softmax in-kernel).
    out_sm = jax.block_until_ready(
        diffuse_mlp_forward(x_small, folded, nb_classes, softmax=True))
    np.testing.assert_allclose(np.asarray(out_sm),
                               np.asarray(ref_original(x_small, True)),
                               rtol=1e-3, atol=1e-3)

    print("KERNEL_OK")
</pallas_src>

<mosaic_0001>
module attributes {stable_mosaic.version = 11 : i64} {
  func.func @kernel(%arg0: i32, %arg1: memref<8x16xf32, #tpu.memory_space<vmem>>, %arg2: memref<16x32xf32, #tpu.memory_space<vmem>>, %arg3: memref<1x32xf32, #tpu.memory_space<vmem>>, %arg4: memref<32x32xf32, #tpu.memory_space<vmem>>, %arg5: memref<1x32xf32, #tpu.memory_space<vmem>>, %arg6: memref<32x4xf32, #tpu.memory_space<vmem>>, %arg7: memref<1x4xf32, #tpu.memory_space<vmem>>, %arg8: memref<8x4xf32, #tpu.memory_space<vmem>>) attributes {dimension_semantics = [#tpu.dimension_semantics<parallel>], iteration_bounds = array<i64: 1>, scalar_prefetch = 0 : i64, scratch_operands = 0 : i64, tpu.core_type = #tpu.core_type<tc>, window_params = [{transform_indices = @transform_0, window_bounds = array<i64: 8, 16>}, {pipeline_mode = #tpu.pipeline_mode<synchronous>, transform_indices = @transform_1, window_bounds = array<i64: 16, 32>}, {pipeline_mode = #tpu.pipeline_mode<synchronous>, transform_indices = @transform_2, window_bounds = array<i64: 1, 32>}, {pipeline_mode = #tpu.pipeline_mode<synchronous>, transform_indices = @transform_3, window_bounds = array<i64: 32, 32>}, {pipeline_mode = #tpu.pipeline_mode<synchronous>, transform_indices = @transform_4, window_bounds = array<i64: 1, 32>}, {pipeline_mode = #tpu.pipeline_mode<synchronous>, transform_indices = @transform_5, window_bounds = array<i64: 32, 4>}, {pipeline_mode = #tpu.pipeline_mode<synchronous>, transform_indices = @transform_6, window_bounds = array<i64: 1, 4>}, {transform_indices = @transform_7, window_bounds = array<i64: 8, 4>}]} {
    %c0 = arith.constant 0 : index
    %c0_0 = arith.constant 0 : index
    %0 = vector.load %arg1[%c0, %c0_0] : memref<8x16xf32, #tpu.memory_space<vmem>>, vector<8x16xf32>
    %c0_1 = arith.constant 0 : index
    %c0_2 = arith.constant 0 : index
    %1 = vector.load %arg2[%c0_1, %c0_2] : memref<16x32xf32, #tpu.memory_space<vmem>>, vector<16x32xf32>
    %c0_3 = arith.constant 0 : index
    %c0_4 = arith.constant 0 : index
    %2 = vector.load %arg3[%c0_3, %c0_4] : memref<1x32xf32, #tpu.memory_space<vmem>>, vector<1x32xf32>
    %cst = arith.constant dense<0.000000e+00> : vector<8x32xf32>
    %3 = tpu.matmul %0, %1, %cst {dimension_numbers = #tpu.dot_dimension_numbers<[1], [0], [0], [1], [0, 0, 1, 1], [], []>} : vector<8x16xf32>, vector<16x32xf32>, vector<8x32xf32> -> vector<8x32xf32>
    %4 = vector.broadcast %2 : vector<1x32xf32> to vector<8x32xf32>
    %5 = arith.addf %3, %4 : vector<8x32xf32>
    %cst_5 = arith.constant 0.000000e+00 : f32
    %6 = vector.broadcast %cst_5 : f32 to vector<8x32xf32>
    %7 = arith.maximumf %5, %6 : vector<8x32xf32>
    %c0_6 = arith.constant 0 : index
    %c0_7 = arith.constant 0 : index
    %8 = vector.load %arg4[%c0_6, %c0_7] : memref<32x32xf32, #tpu.memory_space<vmem>>, vector<32x32xf32>
    %c0_8 = arith.constant 0 : index
    %c0_9 = arith.constant 0 : index
    %9 = vector.load %arg5[%c0_8, %c0_9] : memref<1x32xf32, #tpu.memory_space<vmem>>, vector<1x32xf32>
    %cst_10 = arith.constant dense<0.000000e+00> : vector<8x32xf32>
    %10 = tpu.matmul %7, %8, %cst_10 {dimension_numbers = #tpu.dot_dimension_numbers<[1], [0], [0], [1], [0, 0, 1, 1], [], []>} : vector<8x32xf32>, vector<32x32xf32>, vector<8x32xf32> -> vector<8x32xf32>
    %11 = vector.broadcast %9 : vector<1x32xf32> to vector<8x32xf32>
    %12 = arith.addf %10, %11 : vector<8x32xf32>
    %cst_11 = arith.constant 0.000000e+00 : f32
    %13 = vector.broadcast %cst_11 : f32 to vector<8x32xf32>
    %14 = arith.maximumf %12, %13 : vector<8x32xf32>
    %c0_12 = arith.constant 0 : index
    %c0_13 = arith.constant 0 : index
    %15 = vector.load %arg6[%c0_12, %c0_13] : memref<32x4xf32, #tpu.memory_space<vmem>>, vector<32x4xf32>
    %c0_14 = arith.constant 0 : index
    %c0_15 = arith.constant 0 : index
    %16 = vector.load %arg7[%c0_14, %c0_15] : memref<1x4xf32, #tpu.memory_space<vmem>>, vector<1x4xf32>
    %cst_16 = arith.constant dense<0.000000e+00> : vector<8x4xf32>
    %17 = tpu.matmul %14, %15, %cst_16 {dimension_numbers = #tpu.dot_dimension_numbers<[1], [0], [0], [1], [0, 0, 1, 1], [], []>} : vector<8x32xf32>, vector<32x4xf32>, vector<8x4xf32> -> vector<8x4xf32>
    %18 = vector.broadcast %16 : vector<1x4xf32> to vector<8x4xf32>
    %19 = arith.addf %17, %18 : vector<8x4xf32>
    %c0_17 = arith.constant 0 : index
    %c0_18 = arith.constant 0 : index
    %20 = vector.load %arg8[%c0_17, %c0_18] : memref<8x4xf32, #tpu.memory_space<vmem>>, vector<8x4xf32>
    tpu.vector_store %arg8[%c0_17, %c0_18], %19 {strides = array<i32>} : memref<8x4xf32, #tpu.memory_space<vmem>>, vector<8x4xf32>,
    return
  }
  func.func @transform_0(%arg0: i32) -> (i32, i32) {
    %c0_i32 = arith.constant 0 : i32
    %c0_i32_0 = arith.constant 0 : i32
    return %arg0, %c0_i32 : i32, i32
  }
  func.func @transform_1(%arg0: i32) -> (i32, i32) {
    %c0_i32 = arith.constant 0 : i32
    %c0_i32_0 = arith.constant 0 : i32
    %c0_i32_1 = arith.constant 0 : i32
    return %c0_i32, %c0_i32_0 : i32, i32
  }
  func.func @transform_2(%arg0: i32) -> (i32, i32) {
    %c0_i32 = arith.constant 0 : i32
    %c0_i32_0 = arith.constant 0 : i32
    %c0_i32_1 = arith.constant 0 : i32
    return %c0_i32, %c0_i32_0 : i32, i32
  }
  func.func @transform_3(%arg0: i32) -> (i32, i32) {
    %c0_i32 = arith.constant 0 : i32
    %c0_i32_0 = arith.constant 0 : i32
    %c0_i32_1 = arith.constant 0 : i32
    return %c0_i32, %c0_i32_0 : i32, i32
  }
  func.func @transform_4(%arg0: i32) -> (i32, i32) {
    %c0_i32 = arith.constant 0 : i32
    %c0_i32_0 = arith.constant 0 : i32
    %c0_i32_1 = arith.constant 0 : i32
    return %c0_i32, %c0_i32_0 : i32, i32
  }
  func.func @transform_5(%arg0: i32) -> (i32, i32) {
    %c0_i32 = arith.constant 0 : i32
    %c0_i32_0 = arith.constant 0 : i32
    %c0_i32_1 = arith.constant 0 : i32
    return %c0_i32, %c0_i32_0 : i32, i32
  }
  func.func @transform_6(%arg0: i32) -> (i32, i32) {
    %c0_i32 = arith.constant 0 : i32
    %c0_i32_0 = arith.constant 0 : i32
    %c0_i32_1 = arith.constant 0 : i32
    return %c0_i32, %c0_i32_0 : i32, i32
  }
  func.func @transform_7(%arg0: i32) -> (i32, i32) {
    %c0_i32 = arith.constant 0 : i32
    %c0_i32_0 = arith.constant 0 : i32
    return %arg0, %c0_i32 : i32, i32
  }
}

</mosaic_0001>

<llo_original>
// kernel: tpu_custom_call.1
$region0: #{tpu_custom_call.1}
  #allocation0 [shape = 'u32[]', space=smem, size = 0x4, offset = 0x4, fixed_abs, tag = 'smem constant byte address 0x4 - core index']
  #allocation1 [shape = 'u32[144,128]{1,0:T(1,128)}', space=vmem, size = 0x12000, scoped, tag = 'internal scratch']
  %s0 = inlined_call_operand.vmem [shape: f32[8,16], index: 0, kind: input, shape index: {}]
  %s1 = inlined_call_operand.hbm [shape: f32[16,32], index: 1, kind: input, shape index: {}]
  %s2 = inlined_call_operand.vmem [shape: f32[1,32], index: 2, kind: input, shape index: {}]
  %s3 = inlined_call_operand.vmem [shape: f32[32,32], index: 3, kind: input, shape index: {}]
  %s4 = inlined_call_operand.hbm [shape: f32[1,32], index: 4, kind: input, shape index: {}]
  %s5 = inlined_call_operand.vmem [shape: f32[32,4], index: 5, kind: input, shape index: {}]
  %s6 = inlined_call_operand.vmem [shape: f32[1,4], index: 6, kind: input, shape index: {}]
  %s7 = inlined_call_operand.vmem [shape: f32[8,4], index: 7, kind: output, shape index: {}]
  %s8 = sld [smem:[#allocation0]]
  $region46: #{tpu_custom_call.1} parent=0
    _
  %s10 = ssub.s32 1, %s8
  %s11 = scalar_select 0, %s10, %s8
  $region1: #{tpu_custom_call.1} parent=0
    #allocation2 [shape = 'u8[8192]{0}', space=vmem, size = 0x2000, scoped, tag = 'input window, operand 1, single buffered']
    #allocation3 [shape = 's32[1]{0}', space=sflag, size = 0x4, scoped, tag = 'scoped memory for tpu_custom_call.1']
    #allocation4 [shape = 'u8[512]{0}', space=vmem, size = 0x400, scoped, tag = 'input window, operand 4, single buffered']
    #allocation5 [shape = 's32[1]{0}', space=sflag, size = 0x4, scoped, tag = 'scoped memory for tpu_custom_call.1']
    %12 = vsyncpa [#allocation3], 0
    %13 = vsyncpa [#allocation5], 0
    // Predicated region
    $region2: #{tpu_custom_call.1} parent=1 // pred_check
      _
    $region3: #{tpu_custom_call.1} parent=1 // pred_check_branch
      %15 = sbr.rel (0) target = $region5
    $region4: #{tpu_custom_call.1} parent=1 // pred_region
      _
    $region5: #{tpu_custom_call.1} parent=1 // pred_fallthru
      _
    // Predicated region
    $region6: #{tpu_custom_call.1} parent=1 // pred_check
      _
    $region7: #{tpu_custom_call.1} parent=1 // pred_check_branch
      %17 = sbr.rel (0) target = $region9
    $region8: #{tpu_custom_call.1} parent=1 // pred_region
      %s19 = ssub.s32 256, 256
      %20 = vsyncadd [#allocation3], %s19
      %s21 = sshll.u32 [#allocation2], 4
      %s22 = int_to_ptr.vmem [resolvable:$true] %s21
      %27 = dma.hbm_to_vmem [thread:$0]  %s1, 256, %s22, [#allocation3], 128, 128, 8
    $region9: #{tpu_custom_call.1} parent=1 // pred_fallthru
      _
    // Predicated region
    $region10: #{tpu_custom_call.1} parent=1 // pred_check
      _
    $region11: #{tpu_custom_call.1} parent=1 // pred_check_branch
      %29 = sbr.rel (0) target = $region13
    $region12: #{tpu_custom_call.1} parent=1 // pred_region
      _
    $region13: #{tpu_custom_call.1} parent=1 // pred_fallthru
      _
    // Predicated region
    $region14: #{tpu_custom_call.1} parent=1 // pred_check
      _
    $region15: #{tpu_custom_call.1} parent=1 // pred_check_branch
      %31 = sbr.rel (0) target = $region17
    $region16: #{tpu_custom_call.1} parent=1 // pred_region
      _
    $region17: #{tpu_custom_call.1} parent=1 // pred_fallthru
      _
    // Predicated region
    $region18: #{tpu_custom_call.1} parent=1 // pred_check
      _
    $region19: #{tpu_custom_call.1} parent=1 // pred_check_branch
      %33 = sbr.rel (0) target = $region21
    $region20: #{tpu_custom_call.1} parent=1 // pred_region
      %s35 = ssub.s32 16, 16
      %36 = vsyncadd [#allocation5], %s35
      %s38 = sshll.u32 [#allocation4], 4
      %s39 = int_to_ptr.vmem [resolvable:$true] %s38
      %41 = dma.hbm_to_vmem [thread:$0]  %s4, 16, %s39, [#allocation5]
    $region21: #{tpu_custom_call.1} parent=1 // pred_fallthru
      _
    // Predicated region
    $region22: #{tpu_custom_call.1} parent=1 // pred_check
      _
    $region23: #{tpu_custom_call.1} parent=1 // pred_check_branch
      %43 = sbr.rel (0) target = $region25
    $region24: #{tpu_custom_call.1} parent=1 // pred_region
      _
    $region25: #{tpu_custom_call.1} parent=1 // pred_fallthru
      _
    // Predicated region
    $region26: #{tpu_custom_call.1} parent=1 // pred_check
      _
    $region27: #{tpu_custom_call.1} parent=1 // pred_check_branch
      %45 = sbr.rel (0) target = $region29
    $region28: #{tpu_custom_call.1} parent=1 // pred_region
      _
    $region29: #{tpu_custom_call.1} parent=1 // pred_fallthru
      _
    // Predicated region
    $region30: #{tpu_custom_call.1} parent=1 // pred_check
      _
    $region31: #{tpu_custom_call.1} parent=1 // pred_check_branch
      %47 = sbr.rel (0) target = $region33
    $region32: #{tpu_custom_call.1} parent=1 // pred_region
      %48 = dma.done [#allocation3], 256
    $region33: #{tpu_custom_call.1} parent=1 // pred_fallthru
      _
    // Predicated region
    $region34: #{tpu_custom_call.1} parent=1 // pred_check
      _
    $region35: #{tpu_custom_call.1} parent=1 // pred_check_branch
      %50 = sbr.rel (0) target = $region37
    $region36: #{tpu_custom_call.1} parent=1 // pred_region
      %51 = dma.done [#allocation5], 16
    $region37: #{tpu_custom_call.1} parent=1 // pred_fallthru
      _
    %v52 = vld [vmem:[%s0] sm:$0xff]
    %v53 = vld [vmem:[#allocation2] sm:$0xff]
    %v54 = vld [vmem:[#allocation2 + $0x8] sm:$0xff]
    %v55 = vld [vmem:[%s2] sm:$0x1]
    %v57 = vlaneseq
    %v58 = vshrl.u32 %v57, 7
    %v59 = vsub.s32 0, %v58
    %v60 = vrot.slane %v55, %v59
    %vm62 = vcmask 130048
    %v64 = vsel %vm62, %v52, 0
    %66 = vmatprep.subr.mxu0 0.0
    %67 = vmatpush1.msra.mxu0 0.0
    %68 = vmatprep.subr.mxu0 0.0
    %69 = vmatpush1.msra.mxu0 0.0
    %70 = vmatprep.subr.mxu0 0.0
    %71 = vmatpush1.msra.mxu0 0.0
    %72 = vmatprep.subr.mxu0 0.0
    %73 = vmatpush1.msra.mxu0 0.0
    %74 = vmatprep.subr.mxu0 0.0
    %75 = vmatpush1.msra.mxu0 0.0
    %76 = vmatprep.subr.mxu0 0.0
    %77 = vmatpush1.msra.mxu0 0.0
    %78 = vmatprep.subr.mxu0 0.0
    %79 = vmatpush1.msra.mxu0 0.0
    %80 = vmatprep.subr.mxu0 0.0
    %81 = vmatpush1.msra.mxu0 0.0
    %82 = vmatprep.subr.mxu0 0.0
    %83 = vmatpush1.msra.mxu0 0.0
    %84 = vmatprep.subr.mxu0 0.0
    %85 = vmatpush1.msra.mxu0 0.0
    %86 = vmatprep.subr.mxu0 0.0
    %87 = vmatpush1.msra.mxu0 0.0
    %88 = vmatprep.subr.mxu0 0.0
    %89 = vmatpush1.msra.mxu0 0.0
    %90 = vmatprep.subr.mxu0 0.0
    %91 = vmatpush1.msra.mxu0 0.0
    %92 = vmatprep.subr.mxu0 0.0
    %93 = vmatpush1.msra.mxu0 0.0
    %94 = vmatprep.subr.mxu0 0.0
    %95 = vmatpush1.msra.mxu0 %v54
    %96 = vmatprep.subr.mxu0 0.0
    %97 = vmatpush1.msra.mxu0 %v53
    %98 = vmatprep.subr.mxu0 0.0
    %99 = vmatpush2.msra.mxu0 0.0
    %100 = vmatprep.subr.mxu0 0.0
    %101 = vmatpush2.msra.mxu0 0.0
    %102 = vmatprep.subr.mxu0 0.0
    %103 = vmatpush2.msra.mxu0 0.0
    %104 = vmatprep.subr.mxu0 0.0
    %105 = vmatpush2.msra.mxu0 0.0
    %106 = vmatprep.subr.mxu0 0.0
    %107 = vmatpush2.msra.mxu0 0.0
    %108 = vmatprep.subr.mxu0 0.0
    %109 = vmatpush2.msra.mxu0 0.0
    %110 = vmatprep.subr.mxu0 0.0
    %111 = vmatpush2.msra.mxu0 0.0
    %112 = vmatprep.subr.mxu0 0.0
    %113 = vmatpush2.msra.mxu0 0.0
    %114 = vmatprep.subr.mxu0 0.0
    %115 = vmatpush2.msra.mxu0 0.0
    %116 = vmatprep.subr.mxu0 0.0
    %117 = vmatpush2.msra.mxu0 0.0
    %118 = vmatprep.subr.mxu0 0.0
    %119 = vmatpush2.msra.mxu0 0.0
    %120 = vmatprep.subr.mxu0 0.0
    %121 = vmatpush2.msra.mxu0 0.0
    %122 = vmatprep.subr.mxu0 0.0
    %123 = vmatpush2.msra.mxu0 0.0
    %124 = vmatprep.subr.mxu0 0.0
    %125 = vmatpush2.msra.mxu0 0.0
    %126 = vmatprep.subr.mxu0 0.0
    %127 = vmatpush2.msra.mxu0 0.0
    %128 = vmatprep.subr.mxu0 0.0
    %129 = vmatpush2.msra.mxu0 0.0
    %130 = vmatprep.mubr.f32.mxu0 0.0
    %131 = vmatmul.mubr.f32.gmra.mxu0 %v64
    %v132 = vpop.f32.mrf.mxu0
    %v133 = vadd.f32 %v60, %v132
    %v134 = vpop.f32.mrf.mxu0
    %135 = vdwg.mxu0
    %v136 = vmax.f32 %v133, 0.0
    %v137 = vld [vmem:[%s3] sm:$0xff]
    %v138 = vld [vmem:[%s3 + $0x8] sm:$0xff]
    %v139 = vld [vmem:[%s3 + $0x10] sm:$0xff]
    %v140 = vld [vmem:[%s3 + $0x18] sm:$0xff]
    %v141 = vld [vmem:[#allocation4] sm:$0x1]
    %v143 = vlaneseq
    %v144 = vshrl.u32 %v143, 7
    %v145 = vsub.s32 0, %v144
    %v146 = vrot.slane %v141, %v145
    %vm148 = vcmask 261120
    %v150 = vsel %vm148, %v136, 0
    %152 = vmatprep.subr.mxu0 0.0
    %153 = vmatpush1.msra.mxu0 0.0
    %154 = vmatprep.subr.mxu0 0.0
    %155 = vmatpush1.msra.mxu0 0.0
    %156 = vmatprep.subr.mxu0 0.0
    %157 = vmatpush1.msra.mxu0 0.0
    %158 = vmatprep.subr.mxu0 0.0
    %159 = vmatpush1.msra.mxu0 0.0
    %160 = vmatprep.subr.mxu0 0.0
    %161 = vmatpush1.msra.mxu0 0.0
    %162 = vmatprep.subr.mxu0 0.0
    %163 = vmatpush1.msra.mxu0 0.0
    %164 = vmatprep.subr.mxu0 0.0
    %165 = vmatpush1.msra.mxu0 0.0
    %166 = vmatprep.subr.mxu0 0.0
    %167 = vmatpush1.msra.mxu0 0.0
    %168 = vmatprep.subr.mxu0 0.0
    %169 = vmatpush1.msra.mxu0 0.0
    %170 = vmatprep.subr.mxu0 0.0
    %171 = vmatpush1.msra.mxu0 0.0
    %172 = vmatprep.subr.mxu0 0.0
    %173 = vmatpush1.msra.mxu0 0.0
    %174 = vmatprep.subr.mxu0 0.0
    %175 = vmatpush1.msra.mxu0 0.0
    %176 = vmatprep.subr.mxu0 0.0
    %177 = vmatpush1.msra.mxu0 %v140
    %178 = vmatprep.subr.mxu0 0.0
    %179 = vmatpush1.msra.mxu0 %v139
    %180 = vmatprep.subr.mxu0 0.0
    %181 = vmatpush1.msra.mxu0 %v138
    %182 = vmatprep.subr.mxu0 0.0
    %183 = vmatpush1.msra.mxu0 %v137
    %184 = vmatprep.subr.mxu0 0.0
    %185 = vmatpush2.msra.mxu0 0.0
    %186 = vmatprep.subr.mxu0 0.0
    %187 = vmatpush2.msra.mxu0 0.0
    %188 = vmatprep.subr.mxu0 0.0
    %189 = vmatpush2.msra.mxu0 0.0
    %190 = vmatprep.subr.mxu0 0.0
    %191 = vmatpush2.msra.mxu0 0.0
    %192 = vmatprep.subr.mxu0 0.0
    %193 = vmatpush2.msra.mxu0 0.0
    %194 = vmatprep.subr.mxu0 0.0
    %195 = vmatpush2.msra.mxu0 0.0
    %196 = vmatprep.subr.mxu0 0.0
    %197 = vmatpush2.msra.mxu0 0.0
    %198 = vmatprep.subr.mxu0 0.0
    %199 = vmatpush2.msra.mxu0 0.0
    %200 = vmatprep.subr.mxu0 0.0
    %201 = vmatpush2.msra.mxu0 0.0
    %202 = vmatprep.subr.mxu0 0.0
    %203 = vmatpush2.msra.mxu0 0.0
    %204 = vmatprep.subr.mxu0 0.0
    %205 = vmatpush2.msra.mxu0 0.0
    %206 = vmatprep.subr.mxu0 0.0
    %207 = vmatpush2.msra.mxu0 0.0
    %208 = vmatprep.subr.mxu0 0.0
    %209 = vmatpush2.msra.mxu0 0.0
    %210 = vmatprep.subr.mxu0 0.0
    %211 = vmatpush2.msra.mxu0 0.0
    %212 = vmatprep.subr.mxu0 0.0
    %213 = vmatpush2.msra.mxu0 0.0
    %214 = vmatprep.subr.mxu0 0.0
    %215 = vmatpush2.msra.mxu0 0.0
    %216 = vmatprep.mubr.f32.mxu0 0.0
    %217 = vmatmul.mubr.f32.gmra.mxu0 %v150
    %v218 = vpop.f32.mrf.mxu0
    %v219 = vadd.f32 %v146, %v218
    %v220 = vpop.f32.mrf.mxu0
    %221 = vdwg.mxu0
    %v222 = vmax.f32 %v219, 0.0
    %v223 = vld [vmem:[%s5] sm:$0xff]
    %v224 = vld [vmem:[%s5 + $0x8] sm:$0xff]
    %v225 = vld [vmem:[%s5 + $0x10] sm:$0xff]
    %v226 = vld [vmem:[%s5 + $0x18] sm:$0xff]
    %v227 = vld [vmem:[%s6] sm:$0x1]
    %v229 = vlaneseq
    %v230 = vshrl.u32 %v229, 7
    %v231 = vsub.s32 0, %v230
    %v232 = vrot.slane %v227, %v231
    %v235 = vsel %vm148, %v222, 0
    %237 = vmatprep.subr.mxu0 0.0
    %238 = vmatpush1.msra.mxu0 0.0
    %239 = vmatprep.subr.mxu0 0.0
    %240 = vmatpush1.msra.mxu0 0.0
    %241 = vmatprep.subr.mxu0 0.0
    %242 = vmatpush1.msra.mxu0 0.0
    %243 = vmatprep.subr.mxu0 0.0
    %244 = vmatpush1.msra.mxu0 0.0
    %245 = vmatprep.subr.mxu0 0.0
    %246 = vmatpush1.msra.mxu0 0.0
    %247 = vmatprep.subr.mxu0 0.0
    %248 = vmatpush1.msra.mxu0 0.0
    %249 = vmatprep.subr.mxu0 0.0
    %250 = vmatpush1.msra.mxu0 0.0
    %251 = vmatprep.subr.mxu0 0.0
    %252 = vmatpush1.msra.mxu0 0.0
    %253 = vmatprep.subr.mxu0 0.0
    %254 = vmatpush1.msra.mxu0 0.0
    %255 = vmatprep.subr.mxu0 0.0
    %256 = vmatpush1.msra.mxu0 0.0
    %257 = vmatprep.subr.mxu0 0.0
    %258 = vmatpush1.msra.mxu0 0.0
    %259 = vmatprep.subr.mxu0 0.0
    %260 = vmatpush1.msra.mxu0 0.0
    %261 = vmatprep.subr.mxu0 0.0
    %262 = vmatpush1.msra.mxu0 %v226
    %263 = vmatprep.subr.mxu0 0.0
    %264 = vmatpush1.msra.mxu0 %v225
    %265 = vmatprep.subr.mxu0 0.0
    %266 = vmatpush1.msra.mxu0 %v224
    %267 = vmatprep.subr.mxu0 0.0
    %268 = vmatpush1.msra.mxu0 %v223
    %269 = vmatprep.subr.mxu0 0.0
    %270 = vmatpush2.msra.mxu0 0.0
    %271 = vmatprep.subr.mxu0 0.0
    %272 = vmatpush2.msra.mxu0 0.0
    %273 = vmatprep.subr.mxu0 0.0
    %274 = vmatpush2.msra.mxu0 0.0
    %275 = vmatprep.subr.mxu0 0.0
    %276 = vmatpush2.msra.mxu0 0.0
    %277 = vmatprep.subr.mxu0 0.0
    %278 = vmatpush2.msra.mxu0 0.0
    %279 = vmatprep.subr.mxu0 0.0
    %280 = vmatpush2.msra.mxu0 0.0
    %281 = vmatprep.subr.mxu0 0.0
    %282 = vmatpush2.msra.mxu0 0.0
    %283 = vmatprep.subr.mxu0 0.0
    %284 = vmatpush2.msra.mxu0 0.0
    %285 = vmatprep.subr.mxu0 0.0
    %286 = vmatpush2.msra.mxu0 0.0
    %287 = vmatprep.subr.mxu0 0.0
    %288 = vmatpush2.msra.mxu0 0.0
    %289 = vmatprep.subr.mxu0 0.0
    %290 = vmatpush2.msra.mxu0 0.0
    %291 = vmatprep.subr.mxu0 0.0
    %292 = vmatpush2.msra.mxu0 0.0
    %293 = vmatprep.subr.mxu0 0.0
    %294 = vmatpush2.msra.mxu0 0.0
    %295 = vmatprep.subr.mxu0 0.0
    %296 = vmatpush2.msra.mxu0 0.0
    %297 = vmatprep.subr.mxu0 0.0
    %298 = vmatpush2.msra.mxu0 0.0
    %299 = vmatprep.subr.mxu0 0.0
    %300 = vmatpush2.msra.mxu0 0.0
    %301 = vmatprep.mubr.f32.mxu0 0.0
    %302 = vmatmul.mubr.f32.gmra.mxu0 %v235
    %v303 = vpop.f32.mrf.mxu0
    %v304 = vadd.f32 %v232, %v303
    %v305 = vpop.f32.mrf.mxu0
    %306 = vdwg.mxu0
    %vm307 = vcmask 31744
    %308 = vst.msk [vmem:[%s7] sm:$0xff] %vm307, %v304
    // Predicated region
    $region38: #{tpu_custom_call.1} parent=1 // pred_check
      _
    $region39: #{tpu_custom_call.1} parent=1 // pred_check_branch
      %310 = sbr.rel (0) target = $region41
    $region40: #{tpu_custom_call.1} parent=1 // pred_region
      _
    $region41: #{tpu_custom_call.1} parent=1 // pred_fallthru
      _
    // Predicated region
    $region42: #{tpu_custom_call.1} parent=1 // pred_check
      _
    $region43: #{tpu_custom_call.1} parent=1 // pred_check_branch
      %312 = sbr.rel (0) target = $region45
    $region44: #{tpu_custom_call.1} parent=1 // pred_region
      _
    $region45: #{tpu_custom_call.1} parent=1 // pred_fallthru
      _
    %313 = vsyncpa [#allocation3], 1
    %314 = vsyncpa [#allocation5], 1

</llo_original>
